<compile_context>
chip_gen: v5e
topology: v5e:2x2
jax: 0.10.0
libtpu: 0.0.40
codegen_flags: <defaults>
</compile_context>

<pallas_src>
import functools

import jax
import jax.numpy as jnp
from jax.experimental import pallas as pl
from jax.experimental.pallas import tpu as pltpu


def _round_up(x, m):
    return ((x + m - 1) // m) * m


# ----------------------------- fused linear kernel -----------------------------

def _linear_kernel(x_ref, w_ref, b_ref, o_ref, *, apply_relu):
    x = x_ref[...].astype(jnp.bfloat16)                       # MXU operands in bf16
    y = jnp.dot(x, w_ref[...], preferred_element_type=jnp.float32)  # f32 accumulate
    y = y + b_ref[...]
    if apply_relu:
        y = jnp.maximum(y, 0.0)
    o_ref[...] = y


def pallas_linear(x2d, w, b, apply_relu=False, tile_m=256):
    """x2d: (M, K) f32, w: (K, N) bf16, b: (N,) f32 -> (M, N) f32.

    Tiled over M so realistic T*B stays inside scoped VMEM (16 MiB v5e, 32 MiB
    v6e/v7x) and keeps double-buffered HBM<->VMEM pipelining.  K and N for this
    model are <= 4*hidden, so they stay whole per block.
    """
    M, K = x2d.shape
    N = w.shape[1]
    tm = min(tile_m, _round_up(M, 8))
    return pl.pallas_call(
        functools.partial(_linear_kernel, apply_relu=apply_relu),
        grid=(pl.cdiv(M, tm),),
        in_specs=[
            pl.BlockSpec((tm, K), lambda i: (i, 0)),
            pl.BlockSpec((K, N), lambda i: (0, 0)),
            pl.BlockSpec((1, N), lambda i: (0, 0)),
        ],
        out_specs=pl.BlockSpec((tm, N), lambda i: (i, 0)),
        out_shape=jax.ShapeDtypeStruct((M, N), jnp.float32),
        compiler_params=pltpu.CompilerParams(dimension_semantics=("parallel",)),
    )(x2d, w, b.reshape(1, N))


# ------------------- fused bidirectional, time-chunked LSTM kernel -------------------

def _bilstm_kernel(xf_ref, xb_ref,
                   wih_f_ref, whh_f_ref, bf_ref,
                   wih_b_ref, whh_b_ref, bb_ref,
                   outf_ref, outb_ref,
                   hNf_ref, cNf_ref, hNb_ref, cNb_ref,
                   hf_scr, cf_scr, hb_scr, cb_scr,
                   *, chunk, batch):
    c = pl.program_id(0)
    H = hf_scr.shape[-1]

    @pl.when(c == 0)
    def _():
        hf_scr[...] = jnp.zeros_like(hf_scr)
        cf_scr[...] = jnp.zeros_like(cf_scr)
        hb_scr[...] = jnp.zeros_like(hb_scr)
        cb_scr[...] = jnp.zeros_like(cb_scr)

    # Fused input projection: one well-shaped (chunk*batch, Fin) MXU call per direction
    # (replaces the old separate x_proj pallas_linear + HBM round trip).
    gxf = jnp.dot(xf_ref[...].astype(jnp.bfloat16), wih_f_ref[...],
                  preferred_element_type=jnp.float32) + bf_ref[...]
    gxb = jnp.dot(xb_ref[...].astype(jnp.bfloat16), wih_b_ref[...],
                  preferred_element_type=jnp.float32) + bb_ref[...]

    whh_f = whh_f_ref[...]
    whh_b = whh_b_ref[...]

    def cell(gx, h, c_state, whh):
        # Recurrence matmul in bf16 -> f32 accumulate; gate math stays f32
        # (v5e VPU/EUP have no bf16 path, and f32 keeps the recurrence stable).
        g = gx + jnp.dot(h.astype(jnp.bfloat16), whh,
                         preferred_element_type=jnp.float32)
        # TODO(synk): pad H to a multiple of 128 (and B to 8) for lane-dense gate
        # slices / stores; demo-sized H=32 uses masked sub-128-lane ops.
        i_g = jax.nn.sigmoid(g[:, 0:H])
        f_g = jax.nn.sigmoid(g[:, H:2 * H])
        g_g = jnp.tanh(g[:, 2 * H:3 * H])
        o_g = jax.nn.sigmoid(g[:, 3 * H:4 * H])
        c_new = f_g * c_state + i_g * g_g
        h_new = o_g * jnp.tanh(c_new)
        return h_new, c_new

    hf, cf = hf_scr[...], cf_scr[...]
    hb, cb = hb_scr[...], cb_scr[...]

    # Fully unrolled static loop over the time chunk (equivalent to
    # lax.fori_loop(..., unroll=True)): forward walks its chunk front-to-back,
    # backward walks its mirrored chunk back-to-front.
    for i in range(chunk):
        hf, cf = cell(gxf[i * batch:(i + 1) * batch, :], hf, cf, whh_f)
        outf_ref[i, :, :] = hf
        j = chunk - 1 - i
        hb, cb = cell(gxb[j * batch:(j + 1) * batch, :], hb, cb, whh_b)
        outb_ref[j, :, :] = hb

    hf_scr[...] = hf
    cf_scr[...] = cf
    hb_scr[...] = hb
    cb_scr[...] = cb

    # Resident-accumulator finals: write only once, on the last grid step.
    @pl.when(c == pl.num_programs(0) - 1)
    def _():
        hNf_ref[...] = hf_scr[...]
        cNf_ref[...] = cf_scr[...]
        hNb_ref[...] = hb_scr[...]
        cNb_ref[...] = cb_scr[...]


def _choose_time_chunk(T, B, max_chunk=16):
    """Largest divisor of T (<= max_chunk) whose row block Tc*B is sublane-aligned."""
    best = None
    for d in range(1, min(T, max_chunk) + 1):
        if T % d == 0 and (d * B) % 8 == 0:
            best = d
    if best is None:
        best = T   # whole sequence as one block (block == full dim is always legal)
    return best


def lstm_bidir_layer(x2d, T, B, params_fwd, params_bwd):
    """x2d: (T*B, Fin) f32 -> (out (T, B, 2H), (h_f, c_f), (h_b, c_b))."""
    _, Fin = x2d.shape
    wih_f, whh_f, b_f = params_fwd
    wih_b, whh_b, b_b = params_bwd
    H = whh_f.shape[0]

    Tc = _choose_time_chunk(T, B)
    NC = T // Tc

    x_block_f = pl.BlockSpec((Tc * B, Fin), lambda c: (c, 0))
    x_block_b = pl.BlockSpec((Tc * B, Fin), lambda c: (NC - 1 - c, 0))
    wih_block = pl.BlockSpec((Fin, 4 * H), lambda c: (0, 0))
    whh_block = pl.BlockSpec((H, 4 * H), lambda c: (0, 0))
    b_block = pl.BlockSpec((1, 4 * H), lambda c: (0, 0))
    state_block = pl.BlockSpec((B, H), lambda c: (0, 0))

    out_f, out_b, h_f, c_f, h_b, c_b = pl.pallas_call(
        functools.partial(_bilstm_kernel, chunk=Tc, batch=B),
        grid=(NC,),
        in_specs=[x_block_f, x_block_b,
                  wih_block, whh_block, b_block,
                  wih_block, whh_block, b_block],
        out_specs=(
            pl.BlockSpec((Tc, B, H), lambda c: (c, 0, 0)),
            pl.BlockSpec((Tc, B, H), lambda c: (NC - 1 - c, 0, 0)),
            state_block, state_block, state_block, state_block,
        ),
        out_shape=(
            jax.ShapeDtypeStruct((T, B, H), jnp.float32),
            jax.ShapeDtypeStruct((T, B, H), jnp.float32),
            jax.ShapeDtypeStruct((B, H), jnp.float32),
            jax.ShapeDtypeStruct((B, H), jnp.float32),
            jax.ShapeDtypeStruct((B, H), jnp.float32),
            jax.ShapeDtypeStruct((B, H), jnp.float32),
        ),
        scratch_shapes=[pltpu.VMEM((B, H), jnp.float32) for _ in range(4)],
        compiler_params=pltpu.CompilerParams(dimension_semantics=("arbitrary",)),
    )(x2d, x2d,
      wih_f, whh_f, b_f.reshape(1, 4 * H),
      wih_b, whh_b, b_b.reshape(1, 4 * H))

    out = jnp.concatenate([out_f, out_b], axis=-1)    # (T, B, 2H)
    return out, (h_f, c_f), (h_b, c_b)


# ----------------------------- Model glue -----------------------------

def rnn_forward(x, params, feature=False):
    """Mirrors RNN.forward with h=None."""
    # TODO(synk): training-mode dropout (p=0.2) and nonzero initial (h0, c0) not
    # supported; dropout is eval-mode identity, initial state is zeros.
    T, B, n_input = x.shape

    h1 = pallas_linear(x.reshape(T * B, n_input), params["w1"], params["b1"],
                       apply_relu=True)                       # (T*B, H) f32

    layer_in = h1
    h_list, c_list = [], []
    for l in range(params["num_layers"]):
        p_fwd, p_bwd = params["lstm"][l]
        out, (hf, cf), (hb, cb) = lstm_bidir_layer(layer_in, T, B, p_fwd, p_bwd)
        h_list += [hf, hb]
        c_list += [cf, cb]
        layer_in = out.reshape(T * B, -1)                     # (T*B, 2H)

    h_n = jnp.stack(h_list, axis=0)   # (num_layers*2, B, H) — PyTorch ordering
    c_n = jnp.stack(c_list, axis=0)

    if feature:
        return layer_in.reshape(T, B, -1)

    y = pallas_linear(layer_in, params["w2"], params["b2"])   # (T*B, n_output)
    return y.reshape(T, B, -1), (h_n, c_n)


def init_params(key, n_input, n_output, n_hidden, n_layers=2):
    """Deterministic init mirroring PyTorch's U(-1/sqrt(H), 1/sqrt(H)).

    MXU-facing weights stored in bf16 (halves VMEM/HBM bytes, 2x MXU throughput on
    v6e/v7x, fits v7x's 64 MiB VMEM); biases and all accumulation stay f32.
    """
    keys = iter(jax.random.split(key, 64))
    k = 1.0 / (n_hidden ** 0.5)

    def u(shape, dtype=jnp.float32):
        return jax.random.uniform(next(keys), shape, jnp.float32, -k, k).astype(dtype)

    params = {
        "w1": u((n_input, n_hidden), jnp.bfloat16),           # linear1.weight^T
        "b1": u((n_hidden,)),
        "w2": u((2 * n_hidden, n_output), jnp.bfloat16),      # linear2.weight^T
        "b2": u((n_output,)),
        "num_layers": n_layers,
        "lstm": [],
    }
    in_size = n_hidden
    for _ in range(n_layers):
        layer = []
        for _d in range(2):                                   # forward, reverse
            w_ih_T = u((in_size, 4 * n_hidden), jnp.bfloat16)    # (in, 4H)
            w_hh_T = u((n_hidden, 4 * n_hidden), jnp.bfloat16)   # (H, 4H)
            bias = u((4 * n_hidden,)) + u((4 * n_hidden,))       # b_ih + b_hh (f32)
            layer.append((w_ih_T, w_hh_T, bias))
        params["lstm"].append(tuple(layer))
        in_size = 2 * n_hidden
    return params


if __name__ == "__main__":
    T, B = 8, 2
    n_input, n_hidden, n_output = 16, 32, 10

    key = jax.random.PRNGKey(0)
    kx, kp = jax.random.split(key)
    x = jax.random.normal(kx, (T, B, n_input), jnp.float32)   # (seq, batch, feature)
    params = init_params(kp, n_input, n_output, n_hidden, n_layers=2)

    y, (h_n, c_n) = rnn_forward(x, params)
    jax.block_until_ready((y, h_n, c_n))

    assert y.shape == (T, B, n_output)
    assert h_n.shape == (2 * 2, B, n_hidden)   # num_layers * num_directions
    assert c_n.shape == (2 * 2, B, n_hidden)
    assert jnp.all(jnp.isfinite(y))
    assert jnp.all(jnp.isfinite(h_n)) and jnp.all(jnp.isfinite(c_n))
    print("KERNEL_OK")
</pallas_src>

<mosaic_0001>
module attributes {stable_mosaic.version = 11 : i64} {
  func.func @_linear_kernel(%arg0: i32, %arg1: memref<16x16xf32, #tpu.memory_space<vmem>>, %arg2: memref<16x32xbf16, #tpu.memory_space<vmem>>, %arg3: memref<1x32xf32, #tpu.memory_space<vmem>>, %arg4: memref<16x32xf32, #tpu.memory_space<vmem>>) attributes {dimension_semantics = [#tpu.dimension_semantics<parallel>], iteration_bounds = array<i64: 1>, scalar_prefetch = 0 : i64, scratch_operands = 0 : i64, tpu.core_type = #tpu.core_type<tc>, window_params = [{transform_indices = @transform_0, window_bounds = array<i64: 16, 16>}, {pipeline_mode = #tpu.pipeline_mode<synchronous>, transform_indices = @transform_1, window_bounds = array<i64: 16, 32>}, {pipeline_mode = #tpu.pipeline_mode<synchronous>, transform_indices = @transform_2, window_bounds = array<i64: 1, 32>}, {transform_indices = @transform_3, window_bounds = array<i64: 16, 32>}]} {
    %c0 = arith.constant 0 : index
    %c0_0 = arith.constant 0 : index
    %0 = vector.load %arg1[%c0, %c0_0] : memref<16x16xf32, #tpu.memory_space<vmem>>, vector<16x16xf32>
    %1 = arith.truncf %0 : vector<16x16xf32> to vector<16x16xbf16>
    %c0_1 = arith.constant 0 : index
    %c0_2 = arith.constant 0 : index
    %2 = vector.load %arg2[%c0_1, %c0_2] : memref<16x32xbf16, #tpu.memory_space<vmem>>, vector<16x32xbf16>
    %cst = arith.constant dense<0.000000e+00> : vector<16x32xf32>
    %3 = tpu.matmul %1, %2, %cst {dimension_numbers = #tpu.dot_dimension_numbers<[1], [0], [0], [1], [0, 0, 1, 1], [], []>} : vector<16x16xbf16>, vector<16x32xbf16>, vector<16x32xf32> -> vector<16x32xf32>
    %c0_3 = arith.constant 0 : index
    %c0_4 = arith.constant 0 : index
    %4 = vector.load %arg3[%c0_3, %c0_4] : memref<1x32xf32, #tpu.memory_space<vmem>>, vector<1x32xf32>
    %5 = vector.broadcast %4 : vector<1x32xf32> to vector<16x32xf32>
    %6 = arith.addf %3, %5 : vector<16x32xf32>
    %cst_5 = arith.constant 0.000000e+00 : f32
    %7 = vector.broadcast %cst_5 : f32 to vector<16x32xf32>
    %8 = arith.maximumf %6, %7 : vector<16x32xf32>
    %c0_6 = arith.constant 0 : index
    %c0_7 = arith.constant 0 : index
    %9 = vector.load %arg4[%c0_6, %c0_7] : memref<16x32xf32, #tpu.memory_space<vmem>>, vector<16x32xf32>
    tpu.vector_store %arg4[%c0_6, %c0_7], %8 {strides = array<i32>} : memref<16x32xf32, #tpu.memory_space<vmem>>, vector<16x32xf32>,
    return
  }
  func.func @transform_0(%arg0: i32) -> (i32, i32) {
    %c0_i32 = arith.constant 0 : i32
    %c0_i32_0 = arith.constant 0 : i32
    return %arg0, %c0_i32 : i32, i32
  }
  func.func @transform_1(%arg0: i32) -> (i32, i32) {
    %c0_i32 = arith.constant 0 : i32
    %c0_i32_0 = arith.constant 0 : i32
    %c0_i32_1 = arith.constant 0 : i32
    return %c0_i32, %c0_i32_0 : i32, i32
  }
  func.func @transform_2(%arg0: i32) -> (i32, i32) {
    %c0_i32 = arith.constant 0 : i32
    %c0_i32_0 = arith.constant 0 : i32
    %c0_i32_1 = arith.constant 0 : i32
    return %c0_i32, %c0_i32_0 : i32, i32
  }
  func.func @transform_3(%arg0: i32) -> (i32, i32) {
    %c0_i32 = arith.constant 0 : i32
    %c0_i32_0 = arith.constant 0 : i32
    return %arg0, %c0_i32 : i32, i32
  }
}

</mosaic_0001>

<llo_original>
// kernel: tpu_custom_call.1
$region0: #{tpu_custom_call.1}
  #allocation0 [shape = 'u32[]', space=smem, size = 0x4, offset = 0x4, fixed_abs, tag = 'smem constant byte address 0x4 - core index']
  #allocation1 [shape = 'u32[72,128]{1,0:T(1,128)}', space=vmem, size = 0x9000, scoped, tag = 'internal scratch']
  %s0 = inlined_call_operand.hbm [shape: f32[16,16], index: 0, kind: input, shape index: {}]
  %s1 = inlined_call_operand.hbm [shape: bf16[16,32], index: 1, kind: input, shape index: {}]
  %s2 = inlined_call_operand.vmem [shape: f32[1,32], index: 2, kind: input, shape index: {}]
  %s3 = inlined_call_operand.hbm [shape: f32[16,32], index: 3, kind: output, shape index: {}]
  %s4 = sld [smem:[#allocation0]]
  $region30: #{tpu_custom_call.1} parent=0
    _
  %s6 = ssub.s32 1, %s4
  %s7 = scalar_select 0, %s6, %s4
  $region1: #{tpu_custom_call.1} parent=0
    #allocation2 [shape = 'u8[8192]{0}', space=vmem, size = 0x2000, scoped, tag = 'input window, operand 0, single buffered']
    #allocation3 [shape = 's32[1]{0}', space=sflag, size = 0x4, scoped, tag = 'scoped memory for tpu_custom_call.1']
    #allocation4 [shape = 's32[1]{0}', space=sflag, size = 0x4, scoped, tag = 'scoped memory for tpu_custom_call.1']
    #allocation5 [shape = 'u8[4096]{0}', space=vmem, size = 0x1000, scoped, tag = 'input window, operand 1, single buffered']
    #allocation6 [shape = 's32[1]{0}', space=sflag, size = 0x4, scoped, tag = 'scoped memory for tpu_custom_call.1']
    #allocation7 [shape = 'u8[8192]{0}', space=vmem, size = 0x2000, scoped, tag = 'output window, operand 0, single buffered']
    %8 = vsyncpa [#allocation3], 0
    %9 = vsyncpa [#allocation6], 0
    %10 = vsyncpa [#allocation4], 0
    // Predicated region
    $region2: #{tpu_custom_call.1} parent=1 // pred_check
      _
    $region3: #{tpu_custom_call.1} parent=1 // pred_check_branch
      %12 = sbr.rel (0) target = $region5
    $region4: #{tpu_custom_call.1} parent=1 // pred_region
      %14 = vsyncadd [#allocation3], 0
      %s15 = sshll.u32 %s0, 4
      %s16 = int_to_ptr.hbm [resolvable:$true] %s15
      %s17 = sshll.u32 [#allocation2], 4
      %s18 = int_to_ptr.vmem [resolvable:$true] %s17
      %23 = dma.hbm_to_vmem [thread:$0]  %s16, 256, %s18, [#allocation3], 128, 128, 8
    $region5: #{tpu_custom_call.1} parent=1 // pred_fallthru
      _
    // Predicated region
    $region6: #{tpu_custom_call.1} parent=1 // pred_check
      _
    $region7: #{tpu_custom_call.1} parent=1 // pred_check_branch
      %25 = sbr.rel (0) target = $region9
    $region8: #{tpu_custom_call.1} parent=1 // pred_region
      %27 = vsyncadd [#allocation6], 0
      %s28 = sshll.u32 %s1, 4
      %s29 = int_to_ptr.hbm [resolvable:$true] %s28
      %s30 = sshll.u32 [#allocation5], 4
      %s31 = int_to_ptr.vmem [resolvable:$true] %s30
      %36 = dma.hbm_to_vmem [thread:$0]  %s29, 128, %s31, [#allocation6], 64, 64, 4
    $region9: #{tpu_custom_call.1} parent=1 // pred_fallthru
      _
    // Predicated region
    $region10: #{tpu_custom_call.1} parent=1 // pred_check
      _
    $region11: #{tpu_custom_call.1} parent=1 // pred_check_branch
      %38 = sbr.rel (0) target = $region13
    $region12: #{tpu_custom_call.1} parent=1 // pred_region
      _
    $region13: #{tpu_custom_call.1} parent=1 // pred_fallthru
      _
    // Predicated region
    $region14: #{tpu_custom_call.1} parent=1 // pred_check
      _
    $region15: #{tpu_custom_call.1} parent=1 // pred_check_branch
      %40 = sbr.rel (0) target = $region17
    $region16: #{tpu_custom_call.1} parent=1 // pred_region
      %42 = dma.done [#allocation3], 256
    $region17: #{tpu_custom_call.1} parent=1 // pred_fallthru
      _
    // Predicated region
    $region18: #{tpu_custom_call.1} parent=1 // pred_check
      _
    $region19: #{tpu_custom_call.1} parent=1 // pred_check_branch
      %44 = sbr.rel (0) target = $region21
    $region20: #{tpu_custom_call.1} parent=1 // pred_region
      %46 = dma.done [#allocation6], 128
    $region21: #{tpu_custom_call.1} parent=1 // pred_fallthru
      _
    %v48 = vld [vmem:[#allocation2] sm:$0xff]
    %v49 = vld [vmem:[#allocation2 + $0x8] sm:$0xff]
    %v50 = vpack.c.bf16 %v49, %v48
    %v51 = vld [vmem:[#allocation5] sm:$0xf]
    %v52 = vld [vmem:[#allocation5 + $0x4] sm:$0xf]
    %v53 = vld [vmem:[%s2] sm:$0x1]
    %v55 = vperm.slane %v53, 0
    %v59 = vunpack.c.l.b16 %v51
    %v60 = vunpack.c.l.b16 %v52
    %v61 = vpack.c.b16 %v60, %v59
    %vm63 = vcmask 130048
    %v65 = vsel %vm63, %v50, 0
    %67 = vmatpush.bf16.msra.mxu0 0
    %68 = vmatpush.bf16.msra.mxu0 0
    %69 = vmatpush.bf16.msra.mxu0 0
    %70 = vmatpush.bf16.msra.mxu0 0
    %71 = vmatpush.bf16.msra.mxu0 0
    %72 = vmatpush.bf16.msra.mxu0 0
    %73 = vmatpush.bf16.msra.mxu0 0
    %74 = vmatpush.bf16.msra.mxu0 %v61
    %75 = vmatmul.bf16.gmra.mxu0 %v65
    %v76 = vpop.f32.mrf.mxu0
    %v77 = vadd.f32 %v55, %v76
    %v78 = vpop.f32.mrf.mxu0
    %v79 = vadd.f32 %v55, %v78
    %80 = vdwg.mxu0
    %v81 = vmax.f32 %v77, 0.0
    %v82 = vmax.f32 %v79, 0.0
    %vm83 = vcmask 261120
    %84 = vst.msk [vmem:[#allocation7] sm:$0xff] %vm83, %v81
    %85 = vst.msk [vmem:[#allocation7 + $0x8] sm:$0xff] %vm83, %v82
    // Predicated region
    $region22: #{tpu_custom_call.1} parent=1 // pred_check
      _
    $region23: #{tpu_custom_call.1} parent=1 // pred_check_branch
      %87 = sbr.rel (0) target = $region25
    $region24: #{tpu_custom_call.1} parent=1 // pred_region
      %89 = vsyncadd [#allocation4], 0
      %s90 = sshll.u32 [#allocation7], 4
      %s91 = int_to_ptr.vmem [resolvable:$true] %s90
      %s92 = sshll.u32 %s3, 4
      %s93 = int_to_ptr.hbm [resolvable:$true] %s92
      %98 = dma.vmem_to_hbm [thread:$0]  %s91, 256, %s93, [#allocation4], 128, 128, 8
    $region25: #{tpu_custom_call.1} parent=1 // pred_fallthru
      _
    // Predicated region
    $region26: #{tpu_custom_call.1} parent=1 // pred_check
      _
    $region27: #{tpu_custom_call.1} parent=1 // pred_check_branch
      %100 = sbr.rel (0) target = $region29
    $region28: #{tpu_custom_call.1} parent=1 // pred_region
      %102 = dma.done [#allocation4], 256
    $region29: #{tpu_custom_call.1} parent=1 // pred_fallthru
      _
    %103 = vsyncpa [#allocation3], 1
    %104 = vsyncpa [#allocation6], 1
    %105 = vsyncpa [#allocation4], 1

</llo_original>
